<compile_context>
chip_gen: v7x
topology: tpu7x:2x2x1
jax: 0.10.0
libtpu: 0.0.40
codegen_flags: <defaults>
</compile_context>

<pallas_src>
import functools

import jax
import jax.numpy as jnp
from jax.experimental import pallas as pl
from jax.experimental.pallas import tpu as pltpu


def _yolo_loss_kernel(pred_ref, tgt_ref, out_ref, *,
                      l_coord, l_noobj, n_cells, tile, need_mask):
    p = pred_ref[...].astype(jnp.float32)   # (30, T) channel-major
    t = tgt_ref[...].astype(jnp.float32)    # (30, T)

    t_conf = t[4:5, :]                      # (1, T)
    coo = t_conf > 0.0                      # cell contains an object
    noo = t_conf == 0.0                     # cell contains no object
    if need_mask:
        # Last tile may run past the real number of cells; mask those lanes
        # (their block data is unspecified, so it must never be summed).
        lane = jax.lax.broadcasted_iota(jnp.int32, (1, tile), 1)
        valid = (pl.program_id(0) * tile + lane) < n_cells
        coo = jnp.logical_and(coo, valid)
        noo = jnp.logical_and(noo, valid)

    # ---- no-object confidence term (channels 4 and 9) ----------------------
    d4 = p[4:5, :] - t[4:5, :]
    d9 = p[9:10, :] - t[9:10, :]
    noo_sq = d4 * d4 + d9 * d9                               # (1, T)

    # ---- class term (channels 10..29) ---------------------------------------
    dcls = p[10:, :] - t[10:, :]                             # (20, T)
    cls_sq = jnp.sum(dcls * dcls, axis=0, keepdims=True)     # (1, T)

    # ---- responsible-box selection: IOU of both pred boxes vs target box 1 --
    def corners(box):                                        # box: (5, T)
        x, y, w, h = box[0:1], box[1:2], box[2:3], box[3:4]
        return x - 0.5 * w, y - 0.5 * h, x + 0.5 * w, y + 0.5 * h

    def iou(a, b):                                           # xyxy tuples
        ax1, ay1, ax2, ay2 = a
        bx1, by1, bx2, by2 = b
        iw = jnp.maximum(jnp.minimum(ax2, bx2) - jnp.maximum(ax1, bx1), 0.0)
        ih = jnp.maximum(jnp.minimum(ay2, by2) - jnp.maximum(ay1, by1), 0.0)
        inter = iw * ih
        area_a = (ax2 - ax1) * (ay2 - ay1)
        area_b = (bx2 - bx1) * (by2 - by1)
        # eps: empty / no-object / masked cells give iou=0 instead of 0/0=NaN.
        return inter / (area_a + area_b - inter + 1e-9)

    pb1, pb2, tb1 = p[0:5, :], p[5:10, :], t[0:5, :]
    t1c = corners(tb1)
    iou1 = iou(corners(pb1), t1c)                            # (1, T)
    iou2 = iou(corners(pb2), t1c)                            # (1, T)
    sel2 = iou2 > iou1                                       # ties -> box 0

    rp = jnp.where(sel2, pb2, pb1)                           # (5, T)
    rt = jnp.where(sel2, t[5:10, :], tb1)                    # (5, T)

    # ---- localization + responsible-box confidence terms --------------------
    dxy = rp[0:2, :] - rt[0:2, :]                            # (2, T)
    dwh = jnp.sqrt(rp[2:4, :]) - jnp.sqrt(rt[2:4, :])        # (2, T)
    loc_sq = (jnp.sum(dxy * dxy, axis=0, keepdims=True)
              + jnp.sum(dwh * dwh, axis=0, keepdims=True))   # (1, T)
    dc = rp[4:5, :] - rt[4:5, :]
    contain_sq = dc * dc                                     # (1, T)

    # ---- one fused per-cell weighted loss + a single reduction --------------
    # Factor 2.0: the reference adds contain_loss and an identical
    # not_contain_loss (faithful reproduction of the original code).
    obj_terms = l_coord * loc_sq + 2.0 * contain_sq + cls_sq
    per_cell = (jnp.where(coo, obj_terms, 0.0)
                + jnp.where(noo, l_noobj * noo_sq, 0.0))     # (1, T)
    out_ref[...] = jnp.sum(per_cell).reshape(1, 1, 1)


def _round_up(x, m):
    return ((x + m - 1) // m) * m


def yolo_loss(pred, target, *, l_coord=5.0, l_noobj=0.5, tile_cap=8192):
    """pred, target: (N, S, S, B*5 + 20) float32 / bfloat16. Returns scalar."""
    assert pred.shape == target.shape
    N = int(pred.shape[0])
    D = int(pred.shape[-1])
    C = 1
    for s in pred.shape[:-1]:
        C *= int(s)

    # Channel-major, lane-dense layout: (D, C) with cells on the lane axis.
    pred_cm = pred.reshape(C, D).T
    tgt_cm = target.reshape(C, D).T

    tile = min(int(tile_cap), _round_up(C, 128))   # lane tile, multiple of 128
    num_tiles = (C + tile - 1) // tile
    need_mask = (C % tile) != 0

    kernel = functools.partial(
        _yolo_loss_kernel, l_coord=float(l_coord), l_noobj=float(l_noobj),
        n_cells=C, tile=tile, need_mask=need_mask)

    partials = pl.pallas_call(
        kernel,
        out_shape=jax.ShapeDtypeStruct((num_tiles, 1, 1), jnp.float32),
        grid=(num_tiles,),
        in_specs=[pl.BlockSpec((D, tile), lambda i: (0, i)),
                  pl.BlockSpec((D, tile), lambda i: (0, i))],
        out_specs=pl.BlockSpec((1, 1, 1), lambda i: (i, 0, 0)),
        compiler_params=pltpu.CompilerParams(
            dimension_semantics=("parallel",)),
    )(pred_cm, tgt_cm)
    return jnp.sum(partials) / N


def _yolo_loss_ref(pred, target, *, l_coord=5.0, l_noobj=0.5):
    """Pure-JAX reference (same math, no Pallas) for verification."""
    N, D = pred.shape[0], pred.shape[-1]
    p = pred.reshape(-1, D).astype(jnp.float32)
    t = target.reshape(-1, D).astype(jnp.float32)
    coo = t[:, 4] > 0
    noo = t[:, 4] == 0
    noo_sq = (p[:, 4] - t[:, 4]) ** 2 + (p[:, 9] - t[:, 9]) ** 2
    nooobj_loss = jnp.sum(jnp.where(noo, noo_sq, 0.0))
    cls_sq = jnp.sum((p[:, 10:] - t[:, 10:]) ** 2, axis=-1)
    class_loss = jnp.sum(jnp.where(coo, cls_sq, 0.0))

    def xyxy(b):
        return jnp.concatenate([b[:, :2] - 0.5 * b[:, 2:4],
                                b[:, :2] + 0.5 * b[:, 2:4]], -1)

    def iou(a, b):
        lt = jnp.maximum(a[:, :2], b[:, :2])
        rb = jnp.minimum(a[:, 2:], b[:, 2:])
        wh = jnp.maximum(rb - lt, 0.0)
        inter = wh[:, 0] * wh[:, 1]
        aa = (a[:, 2] - a[:, 0]) * (a[:, 3] - a[:, 1])
        ab = (b[:, 2] - b[:, 0]) * (b[:, 3] - b[:, 1])
        return inter / (aa + ab - inter)

    pb1, pb2, tb1, tb2 = p[:, 0:5], p[:, 5:10], t[:, 0:5], t[:, 5:10]
    iou1 = iou(xyxy(pb1), xyxy(tb1))
    iou2 = iou(xyxy(pb2), xyxy(tb1))
    sel2 = (iou2 > iou1)[:, None]
    rp = jnp.where(sel2, pb2, pb1)
    rt = jnp.where(sel2, tb2, tb1)
    loc_sq = (jnp.sum((rp[:, :2] - rt[:, :2]) ** 2, -1)
              + jnp.sum((jnp.sqrt(rp[:, 2:4]) - jnp.sqrt(rt[:, 2:4])) ** 2, -1))
    loc_loss = jnp.sum(jnp.where(coo, loc_sq, 0.0))
    contain = jnp.sum(jnp.where(coo, (rp[:, 4] - rt[:, 4]) ** 2, 0.0))
    return (l_coord * loc_loss + 2.0 * contain
            + l_noobj * nooobj_loss + class_loss) / N


if __name__ == "__main__":
    key = jax.random.PRNGKey(0)
    N, S, B = 2, 7, 2
    D = B * 5 + 20  # 30
    k1, k2, k3 = jax.random.split(key, 3)

    # Predictions: positive channels so sqrt(w), sqrt(h) are well defined.
    pred = jax.random.uniform(k1, (N, S, S, D), jnp.float32, 0.05, 0.95)
    # Targets: positive coords / class scores; per-cell 0/1 confidences.
    target = jax.random.uniform(k2, (N, S, S, D), jnp.float32, 0.05, 0.95)
    obj = (jax.random.uniform(k3, (N, S, S)) > 0.5).astype(jnp.float32)
    target = target.at[..., 4].set(obj)
    target = target.at[..., 9].set(obj)

    loss = jax.block_until_ready(
        yolo_loss(pred, target, l_coord=5.0, l_noobj=0.5))
    ref = jax.block_until_ready(
        _yolo_loss_ref(pred, target, l_coord=5.0, l_noobj=0.5))

    assert jnp.isfinite(loss), "loss is not finite"
    assert jnp.allclose(loss, ref, rtol=1e-4, atol=1e-4), (loss, ref)

    print("KERNEL_OK")
</pallas_src>

<mosaic_0001>
module attributes {stable_mosaic.version = 11 : i64} {
  func.func @_yolo_loss_kernel(%arg0: i32, %arg1: memref<30x128xf32, #tpu.memory_space<vmem>>, %arg2: memref<30x128xf32, #tpu.memory_space<vmem>>, %arg3: memref<1x1x1xf32, #tpu.memory_space<vmem>>) attributes {dimension_semantics = [#tpu.dimension_semantics<parallel>], iteration_bounds = array<i64: 1>, scalar_prefetch = 0 : i64, scratch_operands = 0 : i64, tpu.core_type = #tpu.core_type<tc>, window_params = [{transform_indices = @transform_0, window_bounds = array<i64: 30, 128>}, {transform_indices = @transform_1, window_bounds = array<i64: 30, 128>}, {transform_indices = @transform_2, window_bounds = array<i64: 1, 1, 1>}]} {
    %c0 = arith.constant 0 : index
    %c0_0 = arith.constant 0 : index
    %0 = vector.load %arg1[%c0, %c0_0] : memref<30x128xf32, #tpu.memory_space<vmem>>, vector<30x128xf32>
    %c0_1 = arith.constant 0 : index
    %c0_2 = arith.constant 0 : index
    %1 = vector.load %arg2[%c0_1, %c0_2] : memref<30x128xf32, #tpu.memory_space<vmem>>, vector<30x128xf32>
    %2 = vector.extract_strided_slice %1 {offsets = [4, 0], sizes = [1, 128], strides = [1, 1]} : vector<30x128xf32> to vector<1x128xf32>
    %cst = arith.constant 0.000000e+00 : f32
    %3 = vector.broadcast %cst : f32 to vector<1x128xf32>
    %4 = arith.cmpf ogt, %2, %3 : vector<1x128xf32>
    %cst_3 = arith.constant 0.000000e+00 : f32
    %5 = vector.broadcast %cst_3 : f32 to vector<1x128xf32>
    %6 = arith.cmpf oeq, %2, %5 : vector<1x128xf32>
    %7 = tpu.iota {dimensions = array<i32: 1>} : vector<1x128xi32>
    %c128_i32 = arith.constant 128 : i32
    %8 = arith.muli %arg0, %c128_i32 : i32
    %9 = vector.broadcast %8 : i32 to vector<1x128xi32>
    %10 = arith.addi %9, %7 : vector<1x128xi32>
    %c98_i32 = arith.constant 98 : i32
    %11 = vector.broadcast %c98_i32 : i32 to vector<1x128xi32>
    %12 = arith.cmpi slt, %10, %11 : vector<1x128xi32>
    %13 = arith.andi %4, %12 : vector<1x128xi1>
    %14 = arith.andi %6, %12 : vector<1x128xi1>
    %15 = vector.extract_strided_slice %0 {offsets = [4, 0], sizes = [1, 128], strides = [1, 1]} : vector<30x128xf32> to vector<1x128xf32>
    %16 = vector.extract_strided_slice %1 {offsets = [4, 0], sizes = [1, 128], strides = [1, 1]} : vector<30x128xf32> to vector<1x128xf32>
    %17 = arith.subf %15, %16 : vector<1x128xf32>
    %18 = vector.extract_strided_slice %0 {offsets = [9, 0], sizes = [1, 128], strides = [1, 1]} : vector<30x128xf32> to vector<1x128xf32>
    %19 = vector.extract_strided_slice %1 {offsets = [9, 0], sizes = [1, 128], strides = [1, 1]} : vector<30x128xf32> to vector<1x128xf32>
    %20 = arith.subf %18, %19 : vector<1x128xf32>
    %21 = arith.mulf %17, %17 : vector<1x128xf32>
    %22 = arith.mulf %20, %20 : vector<1x128xf32>
    %23 = arith.addf %21, %22 : vector<1x128xf32>
    %24 = vector.extract_strided_slice %0 {offsets = [10, 0], sizes = [20, 128], strides = [1, 1]} : vector<30x128xf32> to vector<20x128xf32>
    %25 = vector.extract_strided_slice %1 {offsets = [10, 0], sizes = [20, 128], strides = [1, 1]} : vector<30x128xf32> to vector<20x128xf32>
    %26 = arith.subf %24, %25 : vector<20x128xf32>
    %27 = arith.mulf %26, %26 : vector<20x128xf32>
    %cst_4 = arith.constant dense<0.000000e+00> : vector<128xf32>
    %28 = vector.multi_reduction <add>, %27, %cst_4 [0] : vector<20x128xf32> to vector<128xf32>
    %29 = vector.shape_cast %28 : vector<128xf32> to vector<1x128xf32>
    %30 = vector.extract_strided_slice %0 {offsets = [0, 0], sizes = [5, 128], strides = [1, 1]} : vector<30x128xf32> to vector<5x128xf32>
    %31 = vector.extract_strided_slice %0 {offsets = [5, 0], sizes = [5, 128], strides = [1, 1]} : vector<30x128xf32> to vector<5x128xf32>
    %32 = vector.extract_strided_slice %1 {offsets = [0, 0], sizes = [5, 128], strides = [1, 1]} : vector<30x128xf32> to vector<5x128xf32>
    %33 = vector.extract_strided_slice %32 {offsets = [0, 0], sizes = [1, 128], strides = [1, 1]} : vector<5x128xf32> to vector<1x128xf32>
    %34 = vector.extract_strided_slice %32 {offsets = [1, 0], sizes = [1, 128], strides = [1, 1]} : vector<5x128xf32> to vector<1x128xf32>
    %35 = vector.extract_strided_slice %32 {offsets = [2, 0], sizes = [1, 128], strides = [1, 1]} : vector<5x128xf32> to vector<1x128xf32>
    %36 = vector.extract_strided_slice %32 {offsets = [3, 0], sizes = [1, 128], strides = [1, 1]} : vector<5x128xf32> to vector<1x128xf32>
    %cst_5 = arith.constant 5.000000e-01 : f32
    %37 = vector.broadcast %cst_5 : f32 to vector<1x128xf32>
    %38 = arith.mulf %37, %35 : vector<1x128xf32>
    %39 = arith.subf %33, %38 : vector<1x128xf32>
    %cst_6 = arith.constant 5.000000e-01 : f32
    %40 = vector.broadcast %cst_6 : f32 to vector<1x128xf32>
    %41 = arith.mulf %40, %36 : vector<1x128xf32>
    %42 = arith.subf %34, %41 : vector<1x128xf32>
    %cst_7 = arith.constant 5.000000e-01 : f32
    %43 = vector.broadcast %cst_7 : f32 to vector<1x128xf32>
    %44 = arith.mulf %43, %35 : vector<1x128xf32>
    %45 = arith.addf %33, %44 : vector<1x128xf32>
    %cst_8 = arith.constant 5.000000e-01 : f32
    %46 = vector.broadcast %cst_8 : f32 to vector<1x128xf32>
    %47 = arith.mulf %46, %36 : vector<1x128xf32>
    %48 = arith.addf %34, %47 : vector<1x128xf32>
    %49 = vector.extract_strided_slice %30 {offsets = [0, 0], sizes = [1, 128], strides = [1, 1]} : vector<5x128xf32> to vector<1x128xf32>
    %50 = vector.extract_strided_slice %30 {offsets = [1, 0], sizes = [1, 128], strides = [1, 1]} : vector<5x128xf32> to vector<1x128xf32>
    %51 = vector.extract_strided_slice %30 {offsets = [2, 0], sizes = [1, 128], strides = [1, 1]} : vector<5x128xf32> to vector<1x128xf32>
    %52 = vector.extract_strided_slice %30 {offsets = [3, 0], sizes = [1, 128], strides = [1, 1]} : vector<5x128xf32> to vector<1x128xf32>
    %cst_9 = arith.constant 5.000000e-01 : f32
    %53 = vector.broadcast %cst_9 : f32 to vector<1x128xf32>
    %54 = arith.mulf %53, %51 : vector<1x128xf32>
    %55 = arith.subf %49, %54 : vector<1x128xf32>
    %cst_10 = arith.constant 5.000000e-01 : f32
    %56 = vector.broadcast %cst_10 : f32 to vector<1x128xf32>
    %57 = arith.mulf %56, %52 : vector<1x128xf32>
    %58 = arith.subf %50, %57 : vector<1x128xf32>
    %cst_11 = arith.constant 5.000000e-01 : f32
    %59 = vector.broadcast %cst_11 : f32 to vector<1x128xf32>
    %60 = arith.mulf %59, %51 : vector<1x128xf32>
    %61 = arith.addf %49, %60 : vector<1x128xf32>
    %cst_12 = arith.constant 5.000000e-01 : f32
    %62 = vector.broadcast %cst_12 : f32 to vector<1x128xf32>
    %63 = arith.mulf %62, %52 : vector<1x128xf32>
    %64 = arith.addf %50, %63 : vector<1x128xf32>
    %65 = arith.minimumf %61, %45 : vector<1x128xf32>
    %66 = arith.maximumf %55, %39 : vector<1x128xf32>
    %67 = arith.subf %65, %66 : vector<1x128xf32>
    %cst_13 = arith.constant 0.000000e+00 : f32
    %68 = vector.broadcast %cst_13 : f32 to vector<1x128xf32>
    %69 = arith.maximumf %67, %68 : vector<1x128xf32>
    %70 = arith.minimumf %64, %48 : vector<1x128xf32>
    %71 = arith.maximumf %58, %42 : vector<1x128xf32>
    %72 = arith.subf %70, %71 : vector<1x128xf32>
    %cst_14 = arith.constant 0.000000e+00 : f32
    %73 = vector.broadcast %cst_14 : f32 to vector<1x128xf32>
    %74 = arith.maximumf %72, %73 : vector<1x128xf32>
    %75 = arith.mulf %69, %74 : vector<1x128xf32>
    %76 = arith.subf %61, %55 : vector<1x128xf32>
    %77 = arith.subf %64, %58 : vector<1x128xf32>
    %78 = arith.mulf %76, %77 : vector<1x128xf32>
    %79 = arith.subf %45, %39 : vector<1x128xf32>
    %80 = arith.subf %48, %42 : vector<1x128xf32>
    %81 = arith.mulf %79, %80 : vector<1x128xf32>
    %82 = arith.addf %78, %81 : vector<1x128xf32>
    %83 = arith.subf %82, %75 : vector<1x128xf32>
    %cst_15 = arith.constant 9.99999971E-10 : f32
    %84 = vector.broadcast %cst_15 : f32 to vector<1x128xf32>
    %85 = arith.addf %83, %84 : vector<1x128xf32>
    %86 = arith.divf %75, %85 : vector<1x128xf32>
    %87 = vector.extract_strided_slice %31 {offsets = [0, 0], sizes = [1, 128], strides = [1, 1]} : vector<5x128xf32> to vector<1x128xf32>
    %88 = vector.extract_strided_slice %31 {offsets = [1, 0], sizes = [1, 128], strides = [1, 1]} : vector<5x128xf32> to vector<1x128xf32>
    %89 = vector.extract_strided_slice %31 {offsets = [2, 0], sizes = [1, 128], strides = [1, 1]} : vector<5x128xf32> to vector<1x128xf32>
    %90 = vector.extract_strided_slice %31 {offsets = [3, 0], sizes = [1, 128], strides = [1, 1]} : vector<5x128xf32> to vector<1x128xf32>
    %cst_16 = arith.constant 5.000000e-01 : f32
    %91 = vector.broadcast %cst_16 : f32 to vector<1x128xf32>
    %92 = arith.mulf %91, %89 : vector<1x128xf32>
    %93 = arith.subf %87, %92 : vector<1x128xf32>
    %cst_17 = arith.constant 5.000000e-01 : f32
    %94 = vector.broadcast %cst_17 : f32 to vector<1x128xf32>
    %95 = arith.mulf %94, %90 : vector<1x128xf32>
    %96 = arith.subf %88, %95 : vector<1x128xf32>
    %cst_18 = arith.constant 5.000000e-01 : f32
    %97 = vector.broadcast %cst_18 : f32 to vector<1x128xf32>
    %98 = arith.mulf %97, %89 : vector<1x128xf32>
    %99 = arith.addf %87, %98 : vector<1x128xf32>
    %cst_19 = arith.constant 5.000000e-01 : f32
    %100 = vector.broadcast %cst_19 : f32 to vector<1x128xf32>
    %101 = arith.mulf %100, %90 : vector<1x128xf32>
    %102 = arith.addf %88, %101 : vector<1x128xf32>
    %103 = arith.minimumf %99, %45 : vector<1x128xf32>
    %104 = arith.maximumf %93, %39 : vector<1x128xf32>
    %105 = arith.subf %103, %104 : vector<1x128xf32>
    %cst_20 = arith.constant 0.000000e+00 : f32
    %106 = vector.broadcast %cst_20 : f32 to vector<1x128xf32>
    %107 = arith.maximumf %105, %106 : vector<1x128xf32>
    %108 = arith.minimumf %102, %48 : vector<1x128xf32>
    %109 = arith.maximumf %96, %42 : vector<1x128xf32>
    %110 = arith.subf %108, %109 : vector<1x128xf32>
    %cst_21 = arith.constant 0.000000e+00 : f32
    %111 = vector.broadcast %cst_21 : f32 to vector<1x128xf32>
    %112 = arith.maximumf %110, %111 : vector<1x128xf32>
    %113 = arith.mulf %107, %112 : vector<1x128xf32>
    %114 = arith.subf %99, %93 : vector<1x128xf32>
    %115 = arith.subf %102, %96 : vector<1x128xf32>
    %116 = arith.mulf %114, %115 : vector<1x128xf32>
    %117 = arith.subf %45, %39 : vector<1x128xf32>
    %118 = arith.subf %48, %42 : vector<1x128xf32>
    %119 = arith.mulf %117, %118 : vector<1x128xf32>
    %120 = arith.addf %116, %119 : vector<1x128xf32>
    %121 = arith.subf %120, %113 : vector<1x128xf32>
    %cst_22 = arith.constant 9.99999971E-10 : f32
    %122 = vector.broadcast %cst_22 : f32 to vector<1x128xf32>
    %123 = arith.addf %121, %122 : vector<1x128xf32>
    %124 = arith.divf %113, %123 : vector<1x128xf32>
    %125 = arith.cmpf ogt, %124, %86 : vector<1x128xf32>
    %126 = vector.shape_cast %125 : vector<1x128xi1> to vector<1x128xi1>
    %127 = vector.broadcast %126 : vector<1x128xi1> to vector<5x128xi1>
    %128 = arith.select %127, %31, %30 : vector<5x128xi1>, vector<5x128xf32>
    %129 = vector.extract_strided_slice %1 {offsets = [5, 0], sizes = [5, 128], strides = [1, 1]} : vector<30x128xf32> to vector<5x128xf32>
    %130 = vector.shape_cast %125 : vector<1x128xi1> to vector<1x128xi1>
    %131 = vector.broadcast %130 : vector<1x128xi1> to vector<5x128xi1>
    %132 = arith.select %131, %129, %32 : vector<5x128xi1>, vector<5x128xf32>
    %133 = vector.extract_strided_slice %128 {offsets = [0, 0], sizes = [2, 128], strides = [1, 1]} : vector<5x128xf32> to vector<2x128xf32>
    %134 = vector.extract_strided_slice %132 {offsets = [0, 0], sizes = [2, 128], strides = [1, 1]} : vector<5x128xf32> to vector<2x128xf32>
    %135 = arith.subf %133, %134 : vector<2x128xf32>
    %136 = vector.extract_strided_slice %128 {offsets = [2, 0], sizes = [2, 128], strides = [1, 1]} : vector<5x128xf32> to vector<2x128xf32>
    %137 = math.sqrt %136 : vector<2x128xf32>
    %138 = vector.extract_strided_slice %132 {offsets = [2, 0], sizes = [2, 128], strides = [1, 1]} : vector<5x128xf32> to vector<2x128xf32>
    %139 = math.sqrt %138 : vector<2x128xf32>
    %140 = arith.subf %137, %139 : vector<2x128xf32>
    %141 = arith.mulf %135, %135 : vector<2x128xf32>
    %cst_23 = arith.constant dense<0.000000e+00> : vector<128xf32>
    %142 = vector.multi_reduction <add>, %141, %cst_23 [0] : vector<2x128xf32> to vector<128xf32>
    %143 = vector.shape_cast %142 : vector<128xf32> to vector<1x128xf32>
    %144 = arith.mulf %140, %140 : vector<2x128xf32>
    %cst_24 = arith.constant dense<0.000000e+00> : vector<128xf32>
    %145 = vector.multi_reduction <add>, %144, %cst_24 [0] : vector<2x128xf32> to vector<128xf32>
    %146 = vector.shape_cast %145 : vector<128xf32> to vector<1x128xf32>
    %147 = arith.addf %143, %146 : vector<1x128xf32>
    %148 = vector.extract_strided_slice %128 {offsets = [4, 0], sizes = [1, 128], strides = [1, 1]} : vector<5x128xf32> to vector<1x128xf32>
    %149 = vector.extract_strided_slice %132 {offsets = [4, 0], sizes = [1, 128], strides = [1, 1]} : vector<5x128xf32> to vector<1x128xf32>
    %150 = arith.subf %148, %149 : vector<1x128xf32>
    %151 = arith.mulf %150, %150 : vector<1x128xf32>
    %cst_25 = arith.constant 5.000000e+00 : f32
    %152 = vector.broadcast %cst_25 : f32 to vector<1x128xf32>
    %153 = arith.mulf %152, %147 : vector<1x128xf32>
    %cst_26 = arith.constant 2.000000e+00 : f32
    %154 = vector.broadcast %cst_26 : f32 to vector<1x128xf32>
    %155 = arith.mulf %154, %151 : vector<1x128xf32>
    %156 = arith.addf %153, %155 : vector<1x128xf32>
    %157 = arith.addf %156, %29 : vector<1x128xf32>
    %cst_27 = arith.constant 0.000000e+00 : f32
    %158 = vector.broadcast %cst_27 : f32 to vector<1x128xf32>
    %159 = arith.select %13, %157, %158 : vector<1x128xi1>, vector<1x128xf32>
    %cst_28 = arith.constant 5.000000e-01 : f32
    %160 = vector.broadcast %cst_28 : f32 to vector<1x128xf32>
    %161 = arith.mulf %160, %23 : vector<1x128xf32>
    %cst_29 = arith.constant 0.000000e+00 : f32
    %162 = vector.broadcast %cst_29 : f32 to vector<1x128xf32>
    %163 = arith.select %14, %161, %162 : vector<1x128xi1>, vector<1x128xf32>
    %164 = arith.addf %159, %163 : vector<1x128xf32>
    %165 = vector.shape_cast %164 : vector<1x128xf32> to vector<1x1x128xf32>
    %cst_30 = arith.constant dense<0.000000e+00> : vector<1xf32>
    %166 = vector.multi_reduction <add>, %165, %cst_30 [1, 2] : vector<1x1x128xf32> to vector<1xf32>
    %167 = vector.shape_cast %166 : vector<1xf32> to vector<1x1x1xf32>
    %168 = vector.extract %167[0, 0, 0] : f32 from vector<1x1x1xf32>
    %169 = vector.broadcast %168 : f32 to vector<1x1x1xf32>
    %c0_31 = arith.constant 0 : index
    %c0_32 = arith.constant 0 : index
    %c0_33 = arith.constant 0 : index
    %170 = vector.load %arg3[%c0_31, %c0_32, %c0_33] : memref<1x1x1xf32, #tpu.memory_space<vmem>>, vector<1x1x1xf32>
    tpu.vector_store %arg3[%c0_31, %c0_32, %c0_33], %169 {strides = array<i32>} : memref<1x1x1xf32, #tpu.memory_space<vmem>>, vector<1x1x1xf32>,
    return
  }
  func.func @transform_0(%arg0: i32) -> (i32, i32) {
    %c0_i32 = arith.constant 0 : i32
    %c0_i32_0 = arith.constant 0 : i32
    return %c0_i32, %arg0 : i32, i32
  }
  func.func @transform_1(%arg0: i32) -> (i32, i32) {
    %c0_i32 = arith.constant 0 : i32
    %c0_i32_0 = arith.constant 0 : i32
    return %c0_i32, %arg0 : i32, i32
  }
  func.func @transform_2(%arg0: i32) -> (i32, i32, i32) {
    %c0_i32 = arith.constant 0 : i32
    %c0_i32_0 = arith.constant 0 : i32
    %c0_i32_1 = arith.constant 0 : i32
    return %arg0, %c0_i32, %c0_i32_0 : i32, i32, i32
  }
}

</mosaic_0001>

<llo_original>
// kernel: tpu_custom_call.1
$region0: #{tpu_custom_call.1}
  #allocation0 [shape = 'u32[]', space=smem, size = 0x4, offset = 0x4, fixed_abs, tag = 'smem constant byte address 0x4 - core index']
  #allocation1 [shape = 'u32[144,128]{1,0:T(1,128)}', space=vmem, size = 0x12000, scoped, tag = 'internal scratch']
  %s0 = inlined_call_operand.hbm [shape: f32[30,98], index: 0, kind: input, shape index: {}]
  %s1 = inlined_call_operand.hbm [shape: f32[30,98], index: 1, kind: input, shape index: {}]
  %s2 = inlined_call_operand.hbm [shape: f32[1,1,1], index: 2, kind: output, shape index: {}]
  %s3 = sld [smem:[#allocation0]]
  $region26: #{tpu_custom_call.1} parent=0
    _
  %s5 = ssub.s32 1, %s3
  %s6 = scalar_select 0, %s5, %s3
  $region1: #{tpu_custom_call.1} parent=0
    #allocation2 [shape = 'u8[16384]{0}', space=vmem, size = 0x4000, scoped, tag = 'input window, operand 0, single buffered']
    #allocation3 [shape = 's32[1]{0}', space=sflag, size = 0x4, scoped, tag = 'scoped memory for tpu_custom_call.1']
    #allocation4 [shape = 's32[1]{0}', space=sflag, size = 0x4, scoped, tag = 'scoped memory for tpu_custom_call.1']
    #allocation5 [shape = 'u8[16384]{0}', space=vmem, size = 0x4000, scoped, tag = 'input window, operand 1, single buffered']
    #allocation6 [shape = 's32[1]{0}', space=sflag, size = 0x4, scoped, tag = 'scoped memory for tpu_custom_call.1']
    #allocation7 [shape = 'u8[512]{0}', space=vmem, size = 0x400, scoped, tag = 'output window, operand 0, single buffered']
    %7 = vsyncpa [#allocation3], 0
    %8 = vsyncpa [#allocation6], 0
    %9 = vsyncpa [#allocation4], 0
    // Predicated region
    $region2: #{tpu_custom_call.1} parent=1 // pred_check
      _
    $region3: #{tpu_custom_call.1} parent=1 // pred_check_branch
      %11 = sbr.rel (0) target = $region5
    $region4: #{tpu_custom_call.1} parent=1 // pred_region
      %s13 = ssub.s32 512, 512
      %14 = vsyncadd [#allocation3], %s13
      %s15 = sshll.u32 [#allocation2], 4
      %s16 = int_to_ptr.vmem [resolvable:$true] %s15
      %21 = dma.hbm_to_vmem [thread:$0]  %s0, 512, %s16, [#allocation3], 128, 128, 8
    $region5: #{tpu_custom_call.1} parent=1 // pred_fallthru
      _
    // Predicated region
    $region6: #{tpu_custom_call.1} parent=1 // pred_check
      _
    $region7: #{tpu_custom_call.1} parent=1 // pred_check_branch
      %23 = sbr.rel (0) target = $region9
    $region8: #{tpu_custom_call.1} parent=1 // pred_region
      %s25 = ssub.s32 512, 512
      %26 = vsyncadd [#allocation6], %s25
      %s27 = sshll.u32 [#allocation5], 4
      %s28 = int_to_ptr.vmem [resolvable:$true] %s27
      %33 = dma.hbm_to_vmem [thread:$0]  %s1, 512, %s28, [#allocation6], 128, 128, 8
    $region9: #{tpu_custom_call.1} parent=1 // pred_fallthru
      _
    // Predicated region
    $region10: #{tpu_custom_call.1} parent=1 // pred_check
      _
    $region11: #{tpu_custom_call.1} parent=1 // pred_check_branch
      %35 = sbr.rel (0) target = $region13
    $region12: #{tpu_custom_call.1} parent=1 // pred_region
      %36 = dma.done [#allocation3], 512
    $region13: #{tpu_custom_call.1} parent=1 // pred_fallthru
      _
    // Predicated region
    $region14: #{tpu_custom_call.1} parent=1 // pred_check
      _
    $region15: #{tpu_custom_call.1} parent=1 // pred_check_branch
      %38 = sbr.rel (0) target = $region17
    $region16: #{tpu_custom_call.1} parent=1 // pred_region
      %39 = dma.done [#allocation6], 512
    $region17: #{tpu_custom_call.1} parent=1 // pred_fallthru
      _
    %v40 = vld [vmem:[#allocation2] sm:$0xff]
    %v41 = vld [vmem:[#allocation2 + $0x8] sm:$0xff]
    %v42 = vld [vmem:[#allocation2 + $0x10] sm:$0xff]
    %v43 = vld [vmem:[#allocation2 + $0x18] sm:$0x3f]
    %v44 = vld [vmem:[#allocation5] sm:$0xff]
    %v45 = vld [vmem:[#allocation5 + $0x8] sm:$0xff]
    %v46 = vld [vmem:[#allocation5 + $0x10] sm:$0xff]
    %v47 = vld [vmem:[#allocation5 + $0x18] sm:$0x3f]
    %vm48 = vcmp.gt.f32.partialorder %v44, 0.0
    %vm49 = vcmp.eq.f32.partialorder %v44, 0.0
    %v50 = vlaneseq
    %v51 = vand.u32 %v50, 127
    %s52 = smul.u32 0, 128
    %v53 = vstv %s52
    %v54 = vadd.s32 %v53, %v51
    %vm55 = vcmp.lt.s32.totalorder %v54, 98
    %vm56 = vmand %vm48, %vm55
    %vm57 = vmand %vm49, %vm55
    %v58 = vsub.f32 %v40, %v44
    %v59 = vsub.f32 %v41, %v45
    %v60 = vmul.f32 %v58, %v58
    %v61 = vmul.f32 %v59, %v59
    %v63 = vrot.slane %v61, 5
    %v65 = vadd.f32 %v60, %v63
    %v66 = vsub.f32 %v42, %v46
    %v67 = vsub.f32 %v43, %v47
    %v68 = vmul.f32 %v66, %v66
    %v69 = vmul.f32 %v67, %v67
    %vm72 = vcmask 1045504
    %v73 = vrot.slane %v61, 2
    %v74 = vrot.slane %v68, 2
    %v75 = vsel %vm72, %v73, %v74
    %v76 = vrot.slane %v69, 2
    %v77 = vsel %vm72, %v74, %v76
    %v81 = vadd.f32 %v75, %v77
    %vm82 = vcmask 1043456
    %v83 = vsel %vm82, %v76, 0.0
    %v84 = vadd.f32 %v81, %v83
    %v85 = vrot.slane %v84, 4
    %v86 = vadd.f32 %v84, %v85
    %v87 = vrot.slane %v86, 2
    %v88 = vadd.f32 %v86, %v87
    %v89 = vrot.slane %v88, 1
    %v90 = vadd.f32 %v88, %v89
    %v91 = vmul.f32 %v44, 0.5
    %v93 = vrot.slane %v91, 2
    %v95 = vsub.f32 %v44, %v93
    %v96 = vadd.f32 %v44, %v93
    %v97 = vmul.f32 %v40, 0.5
    %v99 = vrot.slane %v97, 2
    %v101 = vsub.f32 %v40, %v99
    %v102 = vadd.f32 %v40, %v99
    %v103 = vmin.f32 %v102, %v96
    %v104 = vmax.f32 %v101, %v95
    %v105 = vsub.f32 %v103, %v104
    %v106 = vmax.f32 %v105, 0.0
    %v108 = vrot.slane %v106, 1
    %v110 = vmul.f32 %v106, %v108
    %v111 = vsub.f32 %v102, %v101
    %v113 = vrot.slane %v111, 1
    %v115 = vmul.f32 %v111, %v113
    %v116 = vsub.f32 %v96, %v95
    %v118 = vrot.slane %v116, 1
    %v120 = vmul.f32 %v116, %v118
    %v121 = vadd.f32 %v115, %v120
    %v122 = vsub.f32 %v121, %v110
    %v123 = vadd.f32 %v122, 1e-09
    %v124 = vrcp.pop %v123
    %v125 = vmul.f32 %v110, %v124
    %v126 = vmul.f32 %v41, 0.5
    %v128 = vrot.slane %v126, 2
    %v130 = vsub.f32 %v40, %v128
    %v131 = vadd.f32 %v40, %v128
    %v133 = vrot.slane %v96, 3
    %v135 = vmin.f32 %v102, %v133
    %v137 = vrot.slane %v95, 3
    %v139 = vmax.f32 %v101, %v137
    %v140 = vsub.f32 %v135, %v139
    %v141 = vmax.f32 %v140, 0.0
    %v142 = vmin.f32 %v131, %v133
    %v143 = vmax.f32 %v130, %v137
    %v144 = vsub.f32 %v142, %v143
    %v145 = vmax.f32 %v144, 0.0
    %v147 = vrot.slane %v145, 1
    %v149 = vmul.f32 %v141, %v147
    %v150 = vsub.f32 %v131, %v130
    %v152 = vrot.slane %v150, 1
    %v154 = vmul.f32 %v111, %v152
    %v156 = vrot.slane %v120, 3
    %v158 = vadd.f32 %v154, %v156
    %v159 = vsub.f32 %v158, %v149
    %v160 = vadd.f32 %v159, 1e-09
    %v161 = vrcp.pop %v160
    %v162 = vmul.f32 %v149, %v161
    %v164 = vrot.slane %v125, 3
    %vm166 = vcmp.gt.f32.partialorder %v162, %v164
    %v167 = vsel %vm166, 1, 0
    %v168 = vlaneseq
    %v169 = vshrl.u32 %v168, 7
    %v170 = vsub.s32 5, %v169
    %v171 = vrot.slane %v167, %v170
    %vm172 = vcmp.eq.s32.totalorder %v171, 1
    %v174 = vrot.slane %v40, 3
    %v176 = vsel %vm172, %v40, %v174
    %v177 = vsel %vm172, %v41, %v174
    %v179 = vrot.slane %v44, 3
    %v181 = vsel %vm172, %v44, %v179
    %v182 = vsel %vm172, %v45, %v179
    %v183 = vsub.f32 %v176, %v181
    %v184 = vrsqrt.pop %v176
    %v185 = vmul.f32 %v176, %v184
    %vm186 = vcmp.eq.f32.partialorder %v176, inf
    %v187 = vsel %vm186, %v176, %v185
    %vm188 = vcmp.eq.f32.partialorder %v176, 0.0
    %v189 = vand.u32 %v176, 2147483648
    %v190 = vsel %vm188, %v189, %v187
    %v191 = vrsqrt.pop %v177
    %v192 = vmul.f32 %v177, %v191
    %vm193 = vcmp.eq.f32.partialorder %v177, inf
    %v194 = vsel %vm193, %v177, %v192
    %vm195 = vcmp.eq.f32.partialorder %v177, 0.0
    %v196 = vand.u32 %v177, 2147483648
    %v197 = vsel %vm195, %v196, %v194
    %v198 = vrsqrt.pop %v181
    %v199 = vmul.f32 %v181, %v198
    %vm200 = vcmp.eq.f32.partialorder %v181, inf
    %v201 = vsel %vm200, %v181, %v199
    %vm202 = vcmp.eq.f32.partialorder %v181, 0.0
    %v203 = vand.u32 %v181, 2147483648
    %v204 = vsel %vm202, %v203, %v201
    %v205 = vrsqrt.pop %v182
    %v206 = vmul.f32 %v182, %v205
    %vm207 = vcmp.eq.f32.partialorder %v182, inf
    %v208 = vsel %vm207, %v182, %v206
    %vm209 = vcmp.eq.f32.partialorder %v182, 0.0
    %v210 = vand.u32 %v182, 2147483648
    %v211 = vsel %vm209, %v210, %v208
    %v212 = vsub.f32 %v190, %v204
    %v213 = vsub.f32 %v197, %v211
    %v214 = vmul.f32 %v183, %v183
    %v216 = vrot.slane %v214, 5
    %vm218 = vcmask 1041408
    %v219 = vsel %vm218, %v216, 0.0
    %v220 = vrot.slane %v219, 4
    %v221 = vadd.f32 %v219, %v220
    %v222 = vrot.slane %v221, 2
    %v223 = vadd.f32 %v221, %v222
    %v224 = vrot.slane %v223, 1
    %v225 = vadd.f32 %v223, %v224
    %v226 = vmul.f32 %v212, %v212
    %v227 = vmul.f32 %v213, %v213
    %vm230 = vcmask 1040384
    %v231 = vrot.slane %v226, 7
    %v232 = vrot.slane %v227, 7
    %v233 = vsel %vm230, %v231, %v232
    %v235 = vsel %vm218, %v233, 0.0
    %v236 = vrot.slane %v235, 4
    %v237 = vadd.f32 %v235, %v236
    %v238 = vrot.slane %v237, 2
    %v239 = vadd.f32 %v237, %v238
    %v240 = vrot.slane %v239, 1
    %v241 = vadd.f32 %v239, %v240
    %v242 = vadd.f32 %v225, %v241
    %v243 = vsub.f32 %v177, %v182
    %v244 = vmul.f32 %v243, %v243
    %v245 = vmul.f32 %v242, 5.0
    %v246 = vmul.f32 %v244, 2.0
    %v247 = vadd.f32 %v245, %v246
    %v248 = vadd.f32 %v247, %v90
    %v250 = vrot.slane %v248, 5
    %v252 = vsel %vm56, %v250, 0.0
    %v253 = vmul.f32 %v65, 0.5
    %v254 = vsel %vm57, %v253, 0.0
    %v255 = vadd.f32 %v252, %v254
    %v257 = vrot.slane %v255, 4
    %v259 = vsel %vm230, %v257, 0.0
    %260 = vadd.xlane.f32.xlu0 %v259
    %v261 = vpop.xlane.xlu0 %260
    %v262 = vrot.slane %v261, 4
    %v263 = vadd.f32 %v261, %v262
    %v264 = vrot.slane %v263, 2
    %v265 = vadd.f32 %v263, %v264
    %v266 = vrot.slane %v265, 1
    %v267 = vadd.f32 %v265, %v266
    %s268 = vtos %v267
    %v269 = vstv %s268
    %vm270 = vcmask 0
    %271 = vst.msk [vmem:[#allocation7] sm:$0x1] %vm270, %v269
    // Predicated region
    $region18: #{tpu_custom_call.1} parent=1 // pred_check
      _
    $region19: #{tpu_custom_call.1} parent=1 // pred_check_branch
      %273 = sbr.rel (0) target = $region21
    $region20: #{tpu_custom_call.1} parent=1 // pred_region
      %s275 = ssub.s32 16, 16
      %276 = vsyncadd [#allocation4], %s275
      %s278 = sshll.u32 [#allocation7], 4
      %s279 = int_to_ptr.vmem [resolvable:$true] %s278
      %281 = dma.vmem_to_hbm [thread:$0]  %s279, 16, %s2, [#allocation4]
    $region21: #{tpu_custom_call.1} parent=1 // pred_fallthru
      _
    // Predicated region
    $region22: #{tpu_custom_call.1} parent=1 // pred_check
      _
    $region23: #{tpu_custom_call.1} parent=1 // pred_check_branch
      %283 = sbr.rel (0) target = $region25
    $region24: #{tpu_custom_call.1} parent=1 // pred_region
      %284 = dma.done [#allocation4], 16
    $region25: #{tpu_custom_call.1} parent=1 // pred_fallthru
      _
    %285 = vsyncpa [#allocation3], 1
    %286 = vsyncpa [#allocation6], 1
    %287 = vsyncpa [#allocation4], 1

</llo_original>
